<compile_context>
chip_gen: v5e
topology: v5e:2x2
jax: 0.10.0
libtpu: 0.0.40
codegen_flags: <defaults>
</compile_context>

<pallas_src>
import jax
import jax.numpy as jnp
from jax.experimental import pallas as pl
from jax.experimental.pallas import tpu as pltpu


def projection_head_kernel(x_ref, w1_ref, b1_ref, w2_ref, b2_ref, o_ref):
    # x:  (BM, E)  f32      w1: (H, E) bf16/f32   b1: (1, H) f32
    # w2: (P, H)  bf16/f32  b2: (1, P) f32        o:  (BM, P)
    x = x_ref[...]

    # Linear 1: x @ W1^T  (contract x axis 1 with w1 axis 1 -> no transpose needed)
    h = jax.lax.dot_general(
        x.astype(w1_ref.dtype), w1_ref[...],
        dimension_numbers=(((1,), (1,)), ((), ())),
        preferred_element_type=jnp.float32,
    ) + b1_ref[...]
    h = jnp.maximum(h, 0.0)                       # ReLU in f32 (VPU)

    # Linear 2: h @ W2^T
    y = jax.lax.dot_general(
        h.astype(w2_ref.dtype), w2_ref[...],
        dimension_numbers=(((1,), (1,)), ((), ())),
        preferred_element_type=jnp.float32,
    ) + b2_ref[...]

    # F.normalize(y, p=2, dim=-1) == y * rsqrt(max(sumsq, eps^2)), eps = 1e-12
    sumsq = jnp.sum(y * y, axis=-1, keepdims=True)
    inv = jax.lax.rsqrt(jnp.maximum(sumsq, 1e-24))    # EUP, no vector divide
    o_ref[...] = (y * inv).astype(o_ref.dtype)


def projection_head(x, w1, b1, w2, b2, *, block_m=None):
    """x: (B, E); w1: (H, E); b1: (H,); w2: (P, H); b2: (P,). Returns (B, P).

    Weights may be bf16 (recommended: halves HBM->VMEM DMA bytes) or f32;
    accumulation and the epilogue are always f32.
    """
    B, E = x.shape
    H, E2 = w1.shape
    P, H2 = w2.shape
    assert E2 == E and H2 == H

    if block_m is None:
        # Prefer 256-512 row tiles for large batches (pipelining + >=2 grid
        # steps for the two v7x TensorCores); tiny batches use a single tile.
        block_m = B
        for cand in (512, 256, 128, 64, 32, 16, 8):
            if B >= cand and B % cand == 0:
                block_m = cand
                break
    assert B % block_m == 0

    b1r = b1.reshape(1, H)
    b2r = b2.reshape(1, P)

    grid = (B // block_m,)
    return pl.pallas_call(
        projection_head_kernel,
        out_shape=jax.ShapeDtypeStruct((B, P), x.dtype),
        grid_spec=pltpu.PrefetchScalarGridSpec(
            num_scalar_prefetch=0,
            grid=grid,
            in_specs=[
                pl.BlockSpec((block_m, E), lambda i: (i, 0)),  # x tile (pipelined)
                pl.BlockSpec((H, E), lambda i: (0, 0)),        # W1 (resident, DMA'd once)
                pl.BlockSpec((1, H), lambda i: (0, 0)),        # b1 (resident)
                pl.BlockSpec((P, H), lambda i: (0, 0)),        # W2 (resident, DMA'd once)
                pl.BlockSpec((1, P), lambda i: (0, 0)),        # b2 (resident)
            ],
            out_specs=pl.BlockSpec((block_m, P), lambda i: (i, 0)),
        ),
        compiler_params=pltpu.CompilerParams(
            dimension_semantics=("parallel",),
        ),
    )(x, w1, b1r, w2, b2r)


def _reference_f32(x, w1, b1, w2, b2):
    # Full-f32 reference matching the PyTorch module semantics.
    h = jnp.maximum(x @ w1.T + b1, 0.0)
    y = h @ w2.T + b2
    n = jnp.sqrt(jnp.sum(y * y, axis=-1, keepdims=True))
    return y / jnp.maximum(n, 1e-12)


def _reference_matched(x, w1, b1, w2, b2):
    # Reference matching the kernel's mixed-precision numerics (bf16 matmul
    # inputs, f32 accumulation, f32 epilogue).
    h = jax.lax.dot_general(
        x.astype(w1.dtype), w1, (((1,), (1,)), ((), ())),
        preferred_element_type=jnp.float32) + b1
    h = jnp.maximum(h, 0.0)
    y = jax.lax.dot_general(
        h.astype(w2.dtype), w2, (((1,), (1,)), ((), ())),
        preferred_element_type=jnp.float32) + b2
    n = jnp.sqrt(jnp.sum(y * y, axis=-1, keepdims=True))
    return y / jnp.maximum(n, 1e-12)


if __name__ == "__main__":
    # Module hyperparams (hidden dim 1024 is fixed by the module definition).
    embedding_dim = 32
    projection_dim = 64
    hidden_dim = 1024
    batch = 8

    key = jax.random.PRNGKey(0)
    kx, k1w, k1b, k2w, k2b = jax.random.split(key, 5)

    x = jax.random.normal(kx, (batch, embedding_dim), dtype=jnp.float32)

    # Deterministic nn.Linear-style init: U(-1/sqrt(fan_in), 1/sqrt(fan_in)).
    lim1 = 1.0 / (embedding_dim ** 0.5)
    w1 = jax.random.uniform(k1w, (hidden_dim, embedding_dim),
                            minval=-lim1, maxval=lim1, dtype=jnp.float32)
    b1 = jax.random.uniform(k1b, (hidden_dim,),
                            minval=-lim1, maxval=lim1, dtype=jnp.float32)

    lim2 = 1.0 / (hidden_dim ** 0.5)
    w2 = jax.random.uniform(k2w, (projection_dim, hidden_dim),
                            minval=-lim2, maxval=lim2, dtype=jnp.float32)
    b2 = jax.random.uniform(k2b, (projection_dim,),
                            minval=-lim2, maxval=lim2, dtype=jnp.float32)

    # Parameter-init-time cast (done once, not per call): bf16 weights halve
    # the weight DMA bytes; biases stay f32.
    w1_p = w1.astype(jnp.bfloat16)
    w2_p = w2.astype(jnp.bfloat16)

    out = projection_head(x, w1_p, b1, w2_p, b2)
    out = jax.block_until_ready(out)
    assert out.shape == (batch, projection_dim)

    # Check against the mixed-precision-matched reference (tight tolerance)
    ref_m = _reference_matched(x, w1_p, b1, w2_p, b2)
    assert jnp.allclose(out, ref_m, atol=1e-3, rtol=1e-3), "mismatch vs matched ref"

    # Check against the full-f32 PyTorch-semantics reference (bf16-weight tolerance)
    ref = _reference_f32(x, w1, b1, w2, b2)
    assert jnp.allclose(out, ref, atol=2e-2, rtol=2e-2), "mismatch vs f32 reference"

    print("KERNEL_OK")
</pallas_src>

<mosaic_0001>
module attributes {stable_mosaic.version = 11 : i64} {
  func.func @projection_head_kernel(%arg0: i32, %arg1: memref<8x32xf32, #tpu.memory_space<vmem>>, %arg2: memref<1024x32xbf16, #tpu.memory_space<vmem>>, %arg3: memref<1x1024xf32, #tpu.memory_space<vmem>>, %arg4: memref<64x1024xbf16, #tpu.memory_space<vmem>>, %arg5: memref<1x64xf32, #tpu.memory_space<vmem>>, %arg6: memref<8x64xf32, #tpu.memory_space<vmem>>) attributes {dimension_semantics = [#tpu.dimension_semantics<parallel>], iteration_bounds = array<i64: 1>, scalar_prefetch = 0 : i64, scratch_operands = 0 : i64, tpu.core_type = #tpu.core_type<tc>, window_params = [{transform_indices = @transform_0, window_bounds = array<i64: 8, 32>}, {pipeline_mode = #tpu.pipeline_mode<synchronous>, transform_indices = @transform_1, window_bounds = array<i64: 1024, 32>}, {pipeline_mode = #tpu.pipeline_mode<synchronous>, transform_indices = @transform_2, window_bounds = array<i64: 1, 1024>}, {pipeline_mode = #tpu.pipeline_mode<synchronous>, transform_indices = @transform_3, window_bounds = array<i64: 64, 1024>}, {pipeline_mode = #tpu.pipeline_mode<synchronous>, transform_indices = @transform_4, window_bounds = array<i64: 1, 64>}, {transform_indices = @transform_5, window_bounds = array<i64: 8, 64>}]} {
    %c0 = arith.constant 0 : index
    %c0_0 = arith.constant 0 : index
    %0 = vector.load %arg1[%c0, %c0_0] : memref<8x32xf32, #tpu.memory_space<vmem>>, vector<8x32xf32>
    %1 = arith.truncf %0 : vector<8x32xf32> to vector<8x32xbf16>
    %c0_1 = arith.constant 0 : index
    %c0_2 = arith.constant 0 : index
    %2 = vector.load %arg2[%c0_1, %c0_2] : memref<1024x32xbf16, #tpu.memory_space<vmem>>, vector<1024x32xbf16>
    %cst = arith.constant dense<0.000000e+00> : vector<8x1024xf32>
    %3 = tpu.matmul %1, %2, %cst {dimension_numbers = #tpu.dot_dimension_numbers<[1], [1], [0], [0], [0, 0, 1, 0], [], []>} : vector<8x32xbf16>, vector<1024x32xbf16>, vector<8x1024xf32> -> vector<8x1024xf32>
    %c0_3 = arith.constant 0 : index
    %c0_4 = arith.constant 0 : index
    %4 = vector.load %arg3[%c0_3, %c0_4] : memref<1x1024xf32, #tpu.memory_space<vmem>>, vector<1x1024xf32>
    %5 = vector.broadcast %4 : vector<1x1024xf32> to vector<8x1024xf32>
    %6 = arith.addf %3, %5 : vector<8x1024xf32>
    %cst_5 = arith.constant 0.000000e+00 : f32
    %7 = vector.broadcast %cst_5 : f32 to vector<8x1024xf32>
    %8 = arith.maximumf %6, %7 : vector<8x1024xf32>
    %9 = arith.truncf %8 : vector<8x1024xf32> to vector<8x1024xbf16>
    %c0_6 = arith.constant 0 : index
    %c0_7 = arith.constant 0 : index
    %10 = vector.load %arg4[%c0_6, %c0_7] : memref<64x1024xbf16, #tpu.memory_space<vmem>>, vector<64x1024xbf16>
    %cst_8 = arith.constant dense<0.000000e+00> : vector<8x64xf32>
    %11 = tpu.matmul %9, %10, %cst_8 {dimension_numbers = #tpu.dot_dimension_numbers<[1], [1], [0], [0], [0, 0, 1, 0], [], []>} : vector<8x1024xbf16>, vector<64x1024xbf16>, vector<8x64xf32> -> vector<8x64xf32>
    %c0_9 = arith.constant 0 : index
    %c0_10 = arith.constant 0 : index
    %12 = vector.load %arg5[%c0_9, %c0_10] : memref<1x64xf32, #tpu.memory_space<vmem>>, vector<1x64xf32>
    %13 = vector.broadcast %12 : vector<1x64xf32> to vector<8x64xf32>
    %14 = arith.addf %11, %13 : vector<8x64xf32>
    %15 = arith.mulf %14, %14 : vector<8x64xf32>
    %cst_11 = arith.constant dense<0.000000e+00> : vector<8xf32>
    %16 = vector.multi_reduction <add>, %15, %cst_11 [1] : vector<8x64xf32> to vector<8xf32>
    %17 = vector.shape_cast %16 : vector<8xf32> to vector<8x1xf32>
    %cst_12 = arith.constant 1.000000e-24 : f32
    %18 = vector.broadcast %cst_12 : f32 to vector<8x1xf32>
    %19 = arith.maximumf %17, %18 : vector<8x1xf32>
    %20 = math.rsqrt %19 : vector<8x1xf32>
    %21 = vector.broadcast %20 : vector<8x1xf32> to vector<8x64xf32>
    %22 = arith.mulf %14, %21 : vector<8x64xf32>
    %c0_13 = arith.constant 0 : index
    %c0_14 = arith.constant 0 : index
    %23 = vector.load %arg6[%c0_13, %c0_14] : memref<8x64xf32, #tpu.memory_space<vmem>>, vector<8x64xf32>
    tpu.vector_store %arg6[%c0_13, %c0_14], %22 {strides = array<i32>} : memref<8x64xf32, #tpu.memory_space<vmem>>, vector<8x64xf32>,
    return
  }
  func.func @transform_0(%arg0: i32) -> (i32, i32) {
    %c0_i32 = arith.constant 0 : i32
    %c0_i32_0 = arith.constant 0 : i32
    return %arg0, %c0_i32 : i32, i32
  }
  func.func @transform_1(%arg0: i32) -> (i32, i32) {
    %c0_i32 = arith.constant 0 : i32
    %c0_i32_0 = arith.constant 0 : i32
    %c0_i32_1 = arith.constant 0 : i32
    return %c0_i32, %c0_i32_0 : i32, i32
  }
  func.func @transform_2(%arg0: i32) -> (i32, i32) {
    %c0_i32 = arith.constant 0 : i32
    %c0_i32_0 = arith.constant 0 : i32
    %c0_i32_1 = arith.constant 0 : i32
    return %c0_i32, %c0_i32_0 : i32, i32
  }
  func.func @transform_3(%arg0: i32) -> (i32, i32) {
    %c0_i32 = arith.constant 0 : i32
    %c0_i32_0 = arith.constant 0 : i32
    %c0_i32_1 = arith.constant 0 : i32
    return %c0_i32, %c0_i32_0 : i32, i32
  }
  func.func @transform_4(%arg0: i32) -> (i32, i32) {
    %c0_i32 = arith.constant 0 : i32
    %c0_i32_0 = arith.constant 0 : i32
    %c0_i32_1 = arith.constant 0 : i32
    return %c0_i32, %c0_i32_0 : i32, i32
  }
  func.func @transform_5(%arg0: i32) -> (i32, i32) {
    %c0_i32 = arith.constant 0 : i32
    %c0_i32_0 = arith.constant 0 : i32
    return %arg0, %c0_i32 : i32, i32
  }
}

</mosaic_0001>

<llo_original>
// kernel: tpu_custom_call.1
$region0: #{tpu_custom_call.1}
  #allocation0 [shape = 'u32[]', space=smem, size = 0x4, offset = 0x4, fixed_abs, tag = 'smem constant byte address 0x4 - core index']
  #allocation1 [shape = 'u32[72,128]{1,0:T(1,128)}', space=vmem, size = 0x9000, scoped, tag = 'internal scratch']
  %s0 = inlined_call_operand.vmem [shape: f32[8,32], index: 0, kind: input, shape index: {}]
  %s1 = inlined_call_operand.vmem [shape: bf16[1024,32], index: 1, kind: input, shape index: {}]
  %s2 = inlined_call_operand.vmem [shape: f32[1,1024], index: 2, kind: input, shape index: {}]
  %s3 = inlined_call_operand.vmem [shape: bf16[64,1024], index: 3, kind: input, shape index: {}]
  %s4 = inlined_call_operand.vmem [shape: f32[1,64], index: 4, kind: input, shape index: {}]
  %s5 = inlined_call_operand.hbm [shape: f32[8,64], index: 5, kind: output, shape index: {}]
  %s6 = sld [smem:[#allocation0]]
  $region30: #{tpu_custom_call.1} parent=0
    _
  %s8 = ssub.s32 1, %s6
  %s9 = scalar_select 0, %s8, %s6
  $region1: #{tpu_custom_call.1} parent=0
    #allocation2 [shape = 'u8[4096]{0}', space=vmem, size = 0x1000, scoped, tag = 'output window, operand 0, single buffered']
    #allocation3 [shape = 's32[1]{0}', space=sflag, size = 0x4, scoped, tag = 'scoped memory for tpu_custom_call.1']
    %10 = vsyncpa [#allocation3], 0
    // Predicated region
    $region2: #{tpu_custom_call.1} parent=1 // pred_check
      _
    $region3: #{tpu_custom_call.1} parent=1 // pred_check_branch
      %12 = sbr.rel (0) target = $region5
    $region4: #{tpu_custom_call.1} parent=1 // pred_region
      _
    $region5: #{tpu_custom_call.1} parent=1 // pred_fallthru
      _
    // Predicated region
    $region6: #{tpu_custom_call.1} parent=1 // pred_check
      _
    $region7: #{tpu_custom_call.1} parent=1 // pred_check_branch
      %14 = sbr.rel (0) target = $region9
    $region8: #{tpu_custom_call.1} parent=1 // pred_region
      _
    $region9: #{tpu_custom_call.1} parent=1 // pred_fallthru
      _
    // Predicated region
    $region10: #{tpu_custom_call.1} parent=1 // pred_check
      _
    $region11: #{tpu_custom_call.1} parent=1 // pred_check_branch
      %16 = sbr.rel (0) target = $region13
    $region12: #{tpu_custom_call.1} parent=1 // pred_region
      _
    $region13: #{tpu_custom_call.1} parent=1 // pred_fallthru
      _
    // Predicated region
    $region14: #{tpu_custom_call.1} parent=1 // pred_check
      _
    $region15: #{tpu_custom_call.1} parent=1 // pred_check_branch
      %18 = sbr.rel (0) target = $region17
    $region16: #{tpu_custom_call.1} parent=1 // pred_region
      _
    $region17: #{tpu_custom_call.1} parent=1 // pred_fallthru
      _
    // Predicated region
    $region18: #{tpu_custom_call.1} parent=1 // pred_check
      _
    $region19: #{tpu_custom_call.1} parent=1 // pred_check_branch
      %20 = sbr.rel (0) target = $region21
    $region20: #{tpu_custom_call.1} parent=1 // pred_region
      _
    $region21: #{tpu_custom_call.1} parent=1 // pred_fallthru
      _
    %v22 = vld [vmem:[%s0] sm:$0xff]
    %v23 = vpack.c.bf16 %v22, %v22
    %v24 = vld [vmem:[%s1] sm:$0xf]
    %v25 = vld [vmem:[%s1 + $0x4] sm:$0xf]
    %v26 = vld [vmem:[%s1 + $0x8] sm:$0xf]
    %v27 = vld [vmem:[%s1 + $0xc] sm:$0xf]
    %v28 = vld [vmem:[%s1 + $0x10] sm:$0xf]
    %v29 = vld [vmem:[%s1 + $0x14] sm:$0xf]
    %v30 = vld [vmem:[%s1 + $0x18] sm:$0xf]
    %v31 = vld [vmem:[%s1 + $0x1c] sm:$0xf]
    %v32 = vld [vmem:[%s1 + $0x20] sm:$0xf]
    %v33 = vld [vmem:[%s1 + $0x24] sm:$0xf]
    %v34 = vld [vmem:[%s1 + $0x28] sm:$0xf]
    %v35 = vld [vmem:[%s1 + $0x2c] sm:$0xf]
    %v36 = vld [vmem:[%s1 + $0x30] sm:$0xf]
    %v37 = vld [vmem:[%s1 + $0x34] sm:$0xf]
    %v38 = vld [vmem:[%s1 + $0x38] sm:$0xf]
    %v39 = vld [vmem:[%s1 + $0x3c] sm:$0xf]
    %v40 = vld [vmem:[%s1 + $0x40] sm:$0xf]
    %v41 = vld [vmem:[%s1 + $0x44] sm:$0xf]
    %v42 = vld [vmem:[%s1 + $0x48] sm:$0xf]
    %v43 = vld [vmem:[%s1 + $0x4c] sm:$0xf]
    %v44 = vld [vmem:[%s1 + $0x50] sm:$0xf]
    %v45 = vld [vmem:[%s1 + $0x54] sm:$0xf]
    %v46 = vld [vmem:[%s1 + $0x58] sm:$0xf]
    %v47 = vld [vmem:[%s1 + $0x5c] sm:$0xf]
    %v48 = vld [vmem:[%s1 + $0x60] sm:$0xf]
    %v49 = vld [vmem:[%s1 + $0x64] sm:$0xf]
    %v50 = vld [vmem:[%s1 + $0x68] sm:$0xf]
    %v51 = vld [vmem:[%s1 + $0x6c] sm:$0xf]
    %v52 = vld [vmem:[%s1 + $0x70] sm:$0xf]
    %v53 = vld [vmem:[%s1 + $0x74] sm:$0xf]
    %v54 = vld [vmem:[%s1 + $0x78] sm:$0xf]
    %v55 = vld [vmem:[%s1 + $0x7c] sm:$0xf]
    %v56 = vld [vmem:[%s1 + $0x80] sm:$0xf]
    %v57 = vld [vmem:[%s1 + $0x84] sm:$0xf]
    %v58 = vld [vmem:[%s1 + $0x88] sm:$0xf]
    %v59 = vld [vmem:[%s1 + $0x8c] sm:$0xf]
    %v60 = vld [vmem:[%s1 + $0x90] sm:$0xf]
    %v61 = vld [vmem:[%s1 + $0x94] sm:$0xf]
    %v62 = vld [vmem:[%s1 + $0x98] sm:$0xf]
    %v63 = vld [vmem:[%s1 + $0x9c] sm:$0xf]
    %v64 = vld [vmem:[%s1 + $0xa0] sm:$0xf]
    %v65 = vld [vmem:[%s1 + $0xa4] sm:$0xf]
    %v66 = vld [vmem:[%s1 + $0xa8] sm:$0xf]
    %v67 = vld [vmem:[%s1 + $0xac] sm:$0xf]
    %v68 = vld [vmem:[%s1 + $0xb0] sm:$0xf]
    %v69 = vld [vmem:[%s1 + $0xb4] sm:$0xf]
    %v70 = vld [vmem:[%s1 + $0xb8] sm:$0xf]
    %v71 = vld [vmem:[%s1 + $0xbc] sm:$0xf]
    %v72 = vld [vmem:[%s1 + $0xc0] sm:$0xf]
    %v73 = vld [vmem:[%s1 + $0xc4] sm:$0xf]
    %v74 = vld [vmem:[%s1 + $0xc8] sm:$0xf]
    %v75 = vld [vmem:[%s1 + $0xcc] sm:$0xf]
    %v76 = vld [vmem:[%s1 + $0xd0] sm:$0xf]
    %v77 = vld [vmem:[%s1 + $0xd4] sm:$0xf]
    %v78 = vld [vmem:[%s1 + $0xd8] sm:$0xf]
    %v79 = vld [vmem:[%s1 + $0xdc] sm:$0xf]
    %v80 = vld [vmem:[%s1 + $0xe0] sm:$0xf]
    %v81 = vld [vmem:[%s1 + $0xe4] sm:$0xf]
    %v82 = vld [vmem:[%s1 + $0xe8] sm:$0xf]
    %v83 = vld [vmem:[%s1 + $0xec] sm:$0xf]
    %v84 = vld [vmem:[%s1 + $0xf0] sm:$0xf]
    %v85 = vld [vmem:[%s1 + $0xf4] sm:$0xf]
    %v86 = vld [vmem:[%s1 + $0xf8] sm:$0xf]
    %v87 = vld [vmem:[%s1 + $0xfc] sm:$0xf]
    %v88 = vld [vmem:[%s1 + $0x100] sm:$0xf]
    %v89 = vld [vmem:[%s1 + $0x104] sm:$0xf]
    %v90 = vld [vmem:[%s1 + $0x108] sm:$0xf]
    %v91 = vld [vmem:[%s1 + $0x10c] sm:$0xf]
    %v92 = vld [vmem:[%s1 + $0x110] sm:$0xf]
    %v93 = vld [vmem:[%s1 + $0x114] sm:$0xf]
    %v94 = vld [vmem:[%s1 + $0x118] sm:$0xf]
    %v95 = vld [vmem:[%s1 + $0x11c] sm:$0xf]
    %v96 = vld [vmem:[%s1 + $0x120] sm:$0xf]
    %v97 = vld [vmem:[%s1 + $0x124] sm:$0xf]
    %v98 = vld [vmem:[%s1 + $0x128] sm:$0xf]
    %v99 = vld [vmem:[%s1 + $0x12c] sm:$0xf]
    %v100 = vld [vmem:[%s1 + $0x130] sm:$0xf]
    %v101 = vld [vmem:[%s1 + $0x134] sm:$0xf]
    %v102 = vld [vmem:[%s1 + $0x138] sm:$0xf]
    %v103 = vld [vmem:[%s1 + $0x13c] sm:$0xf]
    %v104 = vld [vmem:[%s1 + $0x140] sm:$0xf]
    %v105 = vld [vmem:[%s1 + $0x144] sm:$0xf]
    %v106 = vld [vmem:[%s1 + $0x148] sm:$0xf]
    %v107 = vld [vmem:[%s1 + $0x14c] sm:$0xf]
    %v108 = vld [vmem:[%s1 + $0x150] sm:$0xf]
    %v109 = vld [vmem:[%s1 + $0x154] sm:$0xf]
    %v110 = vld [vmem:[%s1 + $0x158] sm:$0xf]
    %v111 = vld [vmem:[%s1 + $0x15c] sm:$0xf]
    %v112 = vld [vmem:[%s1 + $0x160] sm:$0xf]
    %v113 = vld [vmem:[%s1 + $0x164] sm:$0xf]
    %v114 = vld [vmem:[%s1 + $0x168] sm:$0xf]
    %v115 = vld [vmem:[%s1 + $0x16c] sm:$0xf]
    %v116 = vld [vmem:[%s1 + $0x170] sm:$0xf]
    %v117 = vld [vmem:[%s1 + $0x174] sm:$0xf]
    %v118 = vld [vmem:[%s1 + $0x178] sm:$0xf]
    %v119 = vld [vmem:[%s1 + $0x17c] sm:$0xf]
    %v120 = vld [vmem:[%s1 + $0x180] sm:$0xf]
    %v121 = vld [vmem:[%s1 + $0x184] sm:$0xf]
    %v122 = vld [vmem:[%s1 + $0x188] sm:$0xf]
    %v123 = vld [vmem:[%s1 + $0x18c] sm:$0xf]
    %v124 = vld [vmem:[%s1 + $0x190] sm:$0xf]
    %v125 = vld [vmem:[%s1 + $0x194] sm:$0xf]
    %v126 = vld [vmem:[%s1 + $0x198] sm:$0xf]
    %v127 = vld [vmem:[%s1 + $0x19c] sm:$0xf]
    %v128 = vld [vmem:[%s1 + $0x1a0] sm:$0xf]
    %v129 = vld [vmem:[%s1 + $0x1a4] sm:$0xf]
    %v130 = vld [vmem:[%s1 + $0x1a8] sm:$0xf]
    %v131 = vld [vmem:[%s1 + $0x1ac] sm:$0xf]
    %v132 = vld [vmem:[%s1 + $0x1b0] sm:$0xf]
    %v133 = vld [vmem:[%s1 + $0x1b4] sm:$0xf]
    %v134 = vld [vmem:[%s1 + $0x1b8] sm:$0xf]
    %v135 = vld [vmem:[%s1 + $0x1bc] sm:$0xf]
    %v136 = vld [vmem:[%s1 + $0x1c0] sm:$0xf]
    %v137 = vld [vmem:[%s1 + $0x1c4] sm:$0xf]
    %v138 = vld [vmem:[%s1 + $0x1c8] sm:$0xf]
    %v139 = vld [vmem:[%s1 + $0x1cc] sm:$0xf]
    %v140 = vld [vmem:[%s1 + $0x1d0] sm:$0xf]
    %v141 = vld [vmem:[%s1 + $0x1d4] sm:$0xf]
    %v142 = vld [vmem:[%s1 + $0x1d8] sm:$0xf]
    %v143 = vld [vmem:[%s1 + $0x1dc] sm:$0xf]
    %v144 = vld [vmem:[%s1 + $0x1e0] sm:$0xf]
    %v145 = vld [vmem:[%s1 + $0x1e4] sm:$0xf]
    %v146 = vld [vmem:[%s1 + $0x1e8] sm:$0xf]
    %v147 = vld [vmem:[%s1 + $0x1ec] sm:$0xf]
    %v148 = vld [vmem:[%s1 + $0x1f0] sm:$0xf]
    %v149 = vld [vmem:[%s1 + $0x1f4] sm:$0xf]
    %v150 = vld [vmem:[%s1 + $0x1f8] sm:$0xf]
    %v151 = vld [vmem:[%s1 + $0x1fc] sm:$0xf]
    %v152 = vld [vmem:[%s2] sm:$0xff]
    %v154 = vperm.slane %v152, 0
    %v155 = vperm.slane %v152, 1
    %v156 = vperm.slane %v152, 2
    %v157 = vperm.slane %v152, 3
    %v158 = vperm.slane %v152, 4
    %v159 = vperm.slane %v152, 5
    %v160 = vperm.slane %v152, 6
    %v161 = vperm.slane %v152, 7
    %v298 = vunpack.c.l.b16 %v24
    %v299 = vunpack.c.l.b16 %v25
    %v300 = vunpack.c.l.b16 %v26
    %v301 = vunpack.c.l.b16 %v27
    %v302 = vunpack.c.l.b16 %v28
    %v303 = vunpack.c.l.b16 %v29
    %v304 = vunpack.c.l.b16 %v30
    %v305 = vunpack.c.l.b16 %v31
    %v306 = vunpack.c.l.b16 %v32
    %v307 = vunpack.c.l.b16 %v33
    %v308 = vunpack.c.l.b16 %v34
    %v309 = vunpack.c.l.b16 %v35
    %v310 = vunpack.c.l.b16 %v36
    %v311 = vunpack.c.l.b16 %v37
    %v312 = vunpack.c.l.b16 %v38
    %v313 = vunpack.c.l.b16 %v39
    %v314 = vunpack.c.l.b16 %v40
    %v315 = vunpack.c.l.b16 %v41
    %v316 = vunpack.c.l.b16 %v42
    %v317 = vunpack.c.l.b16 %v43
    %v318 = vunpack.c.l.b16 %v44
    %v319 = vunpack.c.l.b16 %v45
    %v320 = vunpack.c.l.b16 %v46
    %v321 = vunpack.c.l.b16 %v47
    %v322 = vunpack.c.l.b16 %v48
    %v323 = vunpack.c.l.b16 %v49
    %v324 = vunpack.c.l.b16 %v50
    %v325 = vunpack.c.l.b16 %v51
    %v326 = vunpack.c.l.b16 %v52
    %v327 = vunpack.c.l.b16 %v53
    %v328 = vunpack.c.l.b16 %v54
    %v329 = vunpack.c.l.b16 %v55
    %v330 = vunpack.c.l.b16 %v56
    %v331 = vunpack.c.l.b16 %v57
    %v332 = vunpack.c.l.b16 %v58
    %v333 = vunpack.c.l.b16 %v59
    %v334 = vunpack.c.l.b16 %v60
    %v335 = vunpack.c.l.b16 %v61
    %v336 = vunpack.c.l.b16 %v62
    %v337 = vunpack.c.l.b16 %v63
    %v338 = vunpack.c.l.b16 %v64
    %v339 = vunpack.c.l.b16 %v65
    %v340 = vunpack.c.l.b16 %v66
    %v341 = vunpack.c.l.b16 %v67
    %v342 = vunpack.c.l.b16 %v68
    %v343 = vunpack.c.l.b16 %v69
    %v344 = vunpack.c.l.b16 %v70
    %v345 = vunpack.c.l.b16 %v71
    %v346 = vunpack.c.l.b16 %v72
    %v347 = vunpack.c.l.b16 %v73
    %v348 = vunpack.c.l.b16 %v74
    %v349 = vunpack.c.l.b16 %v75
    %v350 = vunpack.c.l.b16 %v76
    %v351 = vunpack.c.l.b16 %v77
    %v352 = vunpack.c.l.b16 %v78
    %v353 = vunpack.c.l.b16 %v79
    %v354 = vunpack.c.l.b16 %v80
    %v355 = vunpack.c.l.b16 %v81
    %v356 = vunpack.c.l.b16 %v82
    %v357 = vunpack.c.l.b16 %v83
    %v358 = vunpack.c.l.b16 %v84
    %v359 = vunpack.c.l.b16 %v85
    %v360 = vunpack.c.l.b16 %v86
    %v361 = vunpack.c.l.b16 %v87
    %v362 = vunpack.c.l.b16 %v88
    %v363 = vunpack.c.l.b16 %v89
    %v364 = vunpack.c.l.b16 %v90
    %v365 = vunpack.c.l.b16 %v91
    %v366 = vunpack.c.l.b16 %v92
    %v367 = vunpack.c.l.b16 %v93
    %v368 = vunpack.c.l.b16 %v94
    %v369 = vunpack.c.l.b16 %v95
    %v370 = vunpack.c.l.b16 %v96
    %v371 = vunpack.c.l.b16 %v97
    %v372 = vunpack.c.l.b16 %v98
    %v373 = vunpack.c.l.b16 %v99
    %v374 = vunpack.c.l.b16 %v100
    %v375 = vunpack.c.l.b16 %v101
    %v376 = vunpack.c.l.b16 %v102
    %v377 = vunpack.c.l.b16 %v103
    %v378 = vunpack.c.l.b16 %v104
    %v379 = vunpack.c.l.b16 %v105
    %v380 = vunpack.c.l.b16 %v106
    %v381 = vunpack.c.l.b16 %v107
    %v382 = vunpack.c.l.b16 %v108
    %v383 = vunpack.c.l.b16 %v109
    %v384 = vunpack.c.l.b16 %v110
    %v385 = vunpack.c.l.b16 %v111
    %v386 = vunpack.c.l.b16 %v112
    %v387 = vunpack.c.l.b16 %v113
    %v388 = vunpack.c.l.b16 %v114
    %v389 = vunpack.c.l.b16 %v115
    %v390 = vunpack.c.l.b16 %v116
    %v391 = vunpack.c.l.b16 %v117
    %v392 = vunpack.c.l.b16 %v118
    %v393 = vunpack.c.l.b16 %v119
    %v394 = vunpack.c.l.b16 %v120
    %v395 = vunpack.c.l.b16 %v121
    %v396 = vunpack.c.l.b16 %v122
    %v397 = vunpack.c.l.b16 %v123
    %v398 = vunpack.c.l.b16 %v124
    %v399 = vunpack.c.l.b16 %v125
    %v400 = vunpack.c.l.b16 %v126
    %v401 = vunpack.c.l.b16 %v127
    %v402 = vunpack.c.l.b16 %v128
    %v403 = vunpack.c.l.b16 %v129
    %v404 = vunpack.c.l.b16 %v130
    %v405 = vunpack.c.l.b16 %v131
    %v406 = vunpack.c.l.b16 %v132
    %v407 = vunpack.c.l.b16 %v133
    %v408 = vunpack.c.l.b16 %v134
    %v409 = vunpack.c.l.b16 %v135
    %v410 = vunpack.c.l.b16 %v136
    %v411 = vunpack.c.l.b16 %v137
    %v412 = vunpack.c.l.b16 %v138
    %v413 = vunpack.c.l.b16 %v139
    %v414 = vunpack.c.l.b16 %v140
    %v415 = vunpack.c.l.b16 %v141
    %v416 = vunpack.c.l.b16 %v142
    %v417 = vunpack.c.l.b16 %v143
    %v418 = vunpack.c.l.b16 %v144
    %v419 = vunpack.c.l.b16 %v145
    %v420 = vunpack.c.l.b16 %v146
    %v421 = vunpack.c.l.b16 %v147
    %v422 = vunpack.c.l.b16 %v148
    %v423 = vunpack.c.l.b16 %v149
    %v424 = vunpack.c.l.b16 %v150
    %v425 = vunpack.c.l.b16 %v151
    %v426 = vpack.c.b16 %v299, %v298
    %v427 = vpack.c.b16 %v301, %v300
    %v428 = vpack.c.b16 %v303, %v302
    %v429 = vpack.c.b16 %v305, %v304
    %v430 = vpack.c.b16 %v307, %v306
    %v431 = vpack.c.b16 %v309, %v308
    %v432 = vpack.c.b16 %v311, %v310
    %v433 = vpack.c.b16 %v313, %v312
    %v434 = vpack.c.b16 %v315, %v314
    %v435 = vpack.c.b16 %v317, %v316
    %v436 = vpack.c.b16 %v319, %v318
    %v437 = vpack.c.b16 %v321, %v320
    %v438 = vpack.c.b16 %v323, %v322
    %v439 = vpack.c.b16 %v325, %v324
    %v440 = vpack.c.b16 %v327, %v326
    %v441 = vpack.c.b16 %v329, %v328
    %v442 = vpack.c.b16 %v331, %v330
    %v443 = vpack.c.b16 %v333, %v332
    %v444 = vpack.c.b16 %v335, %v334
    %v445 = vpack.c.b16 %v337, %v336
    %v446 = vpack.c.b16 %v339, %v338
    %v447 = vpack.c.b16 %v341, %v340
    %v448 = vpack.c.b16 %v343, %v342
    %v449 = vpack.c.b16 %v345, %v344
    %v450 = vpack.c.b16 %v347, %v346
    %v451 = vpack.c.b16 %v349, %v348
    %v452 = vpack.c.b16 %v351, %v350
    %v453 = vpack.c.b16 %v353, %v352
    %v454 = vpack.c.b16 %v355, %v354
    %v455 = vpack.c.b16 %v357, %v356
    %v456 = vpack.c.b16 %v359, %v358
    %v457 = vpack.c.b16 %v361, %v360
    %v458 = vpack.c.b16 %v363, %v362
    %v459 = vpack.c.b16 %v365, %v364
    %v460 = vpack.c.b16 %v367, %v366
    %v461 = vpack.c.b16 %v369, %v368
    %v462 = vpack.c.b16 %v371, %v370
    %v463 = vpack.c.b16 %v373, %v372
    %v464 = vpack.c.b16 %v375, %v374
    %v465 = vpack.c.b16 %v377, %v376
    %v466 = vpack.c.b16 %v379, %v378
    %v467 = vpack.c.b16 %v381, %v380
    %v468 = vpack.c.b16 %v383, %v382
    %v469 = vpack.c.b16 %v385, %v384
    %v470 = vpack.c.b16 %v387, %v386
    %v471 = vpack.c.b16 %v389, %v388
    %v472 = vpack.c.b16 %v391, %v390
    %v473 = vpack.c.b16 %v393, %v392
    %v474 = vpack.c.b16 %v395, %v394
    %v475 = vpack.c.b16 %v397, %v396
    %v476 = vpack.c.b16 %v399, %v398
    %v477 = vpack.c.b16 %v401, %v400
    %v478 = vpack.c.b16 %v403, %v402
    %v479 = vpack.c.b16 %v405, %v404
    %v480 = vpack.c.b16 %v407, %v406
    %v481 = vpack.c.b16 %v409, %v408
    %v482 = vpack.c.b16 %v411, %v410
    %v483 = vpack.c.b16 %v413, %v412
    %v484 = vpack.c.b16 %v415, %v414
    %v485 = vpack.c.b16 %v417, %v416
    %v486 = vpack.c.b16 %v419, %v418
    %v487 = vpack.c.b16 %v421, %v420
    %v488 = vpack.c.b16 %v423, %v422
    %v489 = vpack.c.b16 %v425, %v424
    %vm490 = vcmask 261120
    %v492 = vsel %vm490, %v23, 0
    %v495 = vsel %vm490, %v426, 0
    %v498 = vsel %vm490, %v427, 0
    %v501 = vsel %vm490, %v428, 0
    %v504 = vsel %vm490, %v429, 0
    %v507 = vsel %vm490, %v430, 0
    %v510 = vsel %vm490, %v431, 0
    %v513 = vsel %vm490, %v432, 0
    %v516 = vsel %vm490, %v433, 0
    %v519 = vsel %vm490, %v434, 0
    %v522 = vsel %vm490, %v435, 0
    %v525 = vsel %vm490, %v436, 0
    %v528 = vsel %vm490, %v437, 0
    %v531 = vsel %vm490, %v438, 0
    %v534 = vsel %vm490, %v439, 0
    %v537 = vsel %vm490, %v440, 0
    %v540 = vsel %vm490, %v441, 0
    %v543 = vsel %vm490, %v442, 0
    %v546 = vsel %vm490, %v443, 0
    %v549 = vsel %vm490, %v444, 0
    %v552 = vsel %vm490, %v445, 0
    %v555 = vsel %vm490, %v446, 0
    %v558 = vsel %vm490, %v447, 0
    %v561 = vsel %vm490, %v448, 0
    %v564 = vsel %vm490, %v449, 0
    %v567 = vsel %vm490, %v450, 0
    %v570 = vsel %vm490, %v451, 0
    %v573 = vsel %vm490, %v452, 0
    %v576 = vsel %vm490, %v453, 0
    %v579 = vsel %vm490, %v454, 0
    %v582 = vsel %vm490, %v455, 0
    %v585 = vsel %vm490, %v456, 0
    %v588 = vsel %vm490, %v457, 0
    %v591 = vsel %vm490, %v458, 0
    %v594 = vsel %vm490, %v459, 0
    %v597 = vsel %vm490, %v460, 0
    %v600 = vsel %vm490, %v461, 0
    %v603 = vsel %vm490, %v462, 0
    %v606 = vsel %vm490, %v463, 0
    %v609 = vsel %vm490, %v464, 0
    %v612 = vsel %vm490, %v465, 0
    %v615 = vsel %vm490, %v466, 0
    %v618 = vsel %vm490, %v467, 0
    %v621 = vsel %vm490, %v468, 0
    %v624 = vsel %vm490, %v469, 0
    %v627 = vsel %vm490, %v470, 0
    %v630 = vsel %vm490, %v471, 0
    %v633 = vsel %vm490, %v472, 0
    %v636 = vsel %vm490, %v473, 0
    %v639 = vsel %vm490, %v474, 0
    %v642 = vsel %vm490, %v475, 0
    %v645 = vsel %vm490, %v476, 0
    %v648 = vsel %vm490, %v477, 0
    %v651 = vsel %vm490, %v478, 0
    %v654 = vsel %vm490, %v479, 0
    %v657 = vsel %vm490, %v480, 0
    %v660 = vsel %vm490, %v481, 0
    %v663 = vsel %vm490, %v482, 0
    %v666 = vsel %vm490, %v483, 0
    %v669 = vsel %vm490, %v484, 0
    %v672 = vsel %vm490, %v485, 0
    %v675 = vsel %vm490, %v486, 0
    %v678 = vsel %vm490, %v487, 0
    %v681 = vsel %vm490, %v488, 0
    %v684 = vsel %vm490, %v489, 0
    %686 = vmatpush.bf16.xpose.msra.mxu0 %v516
    %687 = vmatpush.bf16.xpose.msra.mxu0 %v513
    %688 = vmatpush.bf16.xpose.msra.mxu0 %v510
    %689 = vmatpush.bf16.xpose.msra.mxu0 %v507
    %690 = vmatpush.bf16.xpose.msra.mxu0 %v504
    %691 = vmatpush.bf16.xpose.msra.mxu0 %v501
    %692 = vmatpush.bf16.xpose.msra.mxu0 %v498
    %693 = vmatpush.bf16.xpose.msra.mxu0 %v495
    %694 = vmatmul.bf16.gmra.mxu0 %v492
    %v695 = vpop.f32.mrf.mxu0
    %v696 = vadd.f32 %v154, %v695
    %v697 = vpop.f32.mrf.mxu0
    %698 = vdwg.mxu0
    %699 = vmatpush.bf16.xpose.msra.mxu0 %v540
    %700 = vmatpush.bf16.xpose.msra.mxu0 %v537
    %701 = vmatpush.bf16.xpose.msra.mxu0 %v534
    %702 = vmatpush.bf16.xpose.msra.mxu0 %v531
    %703 = vmatpush.bf16.xpose.msra.mxu0 %v528
    %704 = vmatpush.bf16.xpose.msra.mxu0 %v525
    %705 = vmatpush.bf16.xpose.msra.mxu0 %v522
    %706 = vmatpush.bf16.xpose.msra.mxu0 %v519
    %707 = vmatmul.bf16.gmra.mxu0 %v492
    %v708 = vpop.f32.mrf.mxu0
    %v709 = vadd.f32 %v155, %v708
    %v710 = vpop.f32.mrf.mxu0
    %711 = vdwg.mxu0
    %712 = vmatpush.bf16.xpose.msra.mxu0 %v564
    %713 = vmatpush.bf16.xpose.msra.mxu0 %v561
    %714 = vmatpush.bf16.xpose.msra.mxu0 %v558
    %715 = vmatpush.bf16.xpose.msra.mxu0 %v555
    %716 = vmatpush.bf16.xpose.msra.mxu0 %v552
    %717 = vmatpush.bf16.xpose.msra.mxu0 %v549
    %718 = vmatpush.bf16.xpose.msra.mxu0 %v546
    %719 = vmatpush.bf16.xpose.msra.mxu0 %v543
    %720 = vmatmul.bf16.gmra.mxu0 %v492
    %v721 = vpop.f32.mrf.mxu0
    %v722 = vadd.f32 %v156, %v721
    %v723 = vpop.f32.mrf.mxu0
    %724 = vdwg.mxu0
    %725 = vmatpush.bf16.xpose.msra.mxu0 %v588
    %726 = vmatpush.bf16.xpose.msra.mxu0 %v585
    %727 = vmatpush.bf16.xpose.msra.mxu0 %v582
    %728 = vmatpush.bf16.xpose.msra.mxu0 %v579
    %729 = vmatpush.bf16.xpose.msra.mxu0 %v576
    %730 = vmatpush.bf16.xpose.msra.mxu0 %v573
    %731 = vmatpush.bf16.xpose.msra.mxu0 %v570
    %732 = vmatpush.bf16.xpose.msra.mxu0 %v567
    %733 = vmatmul.bf16.gmra.mxu0 %v492
    %v734 = vpop.f32.mrf.mxu0
    %v735 = vadd.f32 %v157, %v734
    %v736 = vpop.f32.mrf.mxu0
    %737 = vdwg.mxu0
    %738 = vmatpush.bf16.xpose.msra.mxu0 %v612
    %739 = vmatpush.bf16.xpose.msra.mxu0 %v609
    %740 = vmatpush.bf16.xpose.msra.mxu0 %v606
    %741 = vmatpush.bf16.xpose.msra.mxu0 %v603
    %742 = vmatpush.bf16.xpose.msra.mxu0 %v600
    %743 = vmatpush.bf16.xpose.msra.mxu0 %v597
    %744 = vmatpush.bf16.xpose.msra.mxu0 %v594
    %745 = vmatpush.bf16.xpose.msra.mxu0 %v591
    %746 = vmatmul.bf16.gmra.mxu0 %v492
    %v747 = vpop.f32.mrf.mxu0
    %v748 = vadd.f32 %v158, %v747
    %v749 = vpop.f32.mrf.mxu0
    %750 = vdwg.mxu0
    %751 = vmatpush.bf16.xpose.msra.mxu0 %v636
    %752 = vmatpush.bf16.xpose.msra.mxu0 %v633
    %753 = vmatpush.bf16.xpose.msra.mxu0 %v630
    %754 = vmatpush.bf16.xpose.msra.mxu0 %v627
    %755 = vmatpush.bf16.xpose.msra.mxu0 %v624
    %756 = vmatpush.bf16.xpose.msra.mxu0 %v621
    %757 = vmatpush.bf16.xpose.msra.mxu0 %v618
    %758 = vmatpush.bf16.xpose.msra.mxu0 %v615
    %759 = vmatmul.bf16.gmra.mxu0 %v492
    %v760 = vpop.f32.mrf.mxu0
    %v761 = vadd.f32 %v159, %v760
    %v762 = vpop.f32.mrf.mxu0
    %763 = vdwg.mxu0
    %764 = vmatpush.bf16.xpose.msra.mxu0 %v660
    %765 = vmatpush.bf16.xpose.msra.mxu0 %v657
    %766 = vmatpush.bf16.xpose.msra.mxu0 %v654
    %767 = vmatpush.bf16.xpose.msra.mxu0 %v651
    %768 = vmatpush.bf16.xpose.msra.mxu0 %v648
    %769 = vmatpush.bf16.xpose.msra.mxu0 %v645
    %770 = vmatpush.bf16.xpose.msra.mxu0 %v642
    %771 = vmatpush.bf16.xpose.msra.mxu0 %v639
    %772 = vmatmul.bf16.gmra.mxu0 %v492
    %v773 = vpop.f32.mrf.mxu0
    %v774 = vadd.f32 %v160, %v773
    %v775 = vpop.f32.mrf.mxu0
    %776 = vdwg.mxu0
    %777 = vmatpush.bf16.xpose.msra.mxu0 %v684
    %778 = vmatpush.bf16.xpose.msra.mxu0 %v681
    %779 = vmatpush.bf16.xpose.msra.mxu0 %v678
    %780 = vmatpush.bf16.xpose.msra.mxu0 %v675
    %781 = vmatpush.bf16.xpose.msra.mxu0 %v672
    %782 = vmatpush.bf16.xpose.msra.mxu0 %v669
    %783 = vmatpush.bf16.xpose.msra.mxu0 %v666
    %784 = vmatpush.bf16.xpose.msra.mxu0 %v663
    %785 = vmatmul.bf16.gmra.mxu0 %v492
    %v786 = vpop.f32.mrf.mxu0
    %v787 = vadd.f32 %v161, %v786
    %v788 = vpop.f32.mrf.mxu0
    %789 = vdwg.mxu0
    %v790 = vmax.f32 %v696, 0.0
    %v791 = vmax.f32 %v709, 0.0
    %v792 = vmax.f32 %v722, 0.0
    %v793 = vmax.f32 %v735, 0.0
    %v794 = vmax.f32 %v748, 0.0
    %v795 = vmax.f32 %v761, 0.0
    %v796 = vmax.f32 %v774, 0.0
    %v797 = vmax.f32 %v787, 0.0
    %v798 = vpack.c.bf16 %v790, %v790
    %v799 = vpack.c.bf16 %v791, %v791
    %v800 = vpack.c.bf16 %v792, %v792
    %v801 = vpack.c.bf16 %v793, %v793
    %v802 = vpack.c.bf16 %v794, %v794
    %v803 = vpack.c.bf16 %v795, %v795
    %v804 = vpack.c.bf16 %v796, %v796
    %v805 = vpack.c.bf16 %v797, %v797
    %v806 = vld [vmem:[%s3] sm:$0xff]
    %v807 = vld [vmem:[%s3 + $0x8] sm:$0xff]
    %v808 = vld [vmem:[%s3 + $0x10] sm:$0xff]
    %v809 = vld [vmem:[%s3 + $0x18] sm:$0xff]
    %v810 = vld [vmem:[%s3 + $0x20] sm:$0xff]
    %v811 = vld [vmem:[%s3 + $0x28] sm:$0xff]
    %v812 = vld [vmem:[%s3 + $0x30] sm:$0xff]
    %v813 = vld [vmem:[%s3 + $0x38] sm:$0xff]
    %v814 = vld [vmem:[%s3 + $0x40] sm:$0xff]
    %v815 = vld [vmem:[%s3 + $0x48] sm:$0xff]
    %v816 = vld [vmem:[%s3 + $0x50] sm:$0xff]
    %v817 = vld [vmem:[%s3 + $0x58] sm:$0xff]
    %v818 = vld [vmem:[%s3 + $0x60] sm:$0xff]
    %v819 = vld [vmem:[%s3 + $0x68] sm:$0xff]
    %v820 = vld [vmem:[%s3 + $0x70] sm:$0xff]
    %v821 = vld [vmem:[%s3 + $0x78] sm:$0xff]
    %v822 = vld [vmem:[%s3 + $0x80] sm:$0xff]
    %v823 = vld [vmem:[%s3 + $0x88] sm:$0xff]
    %v824 = vld [vmem:[%s3 + $0x90] sm:$0xff]
    %v825 = vld [vmem:[%s3 + $0x98] sm:$0xff]
    %v826 = vld [vmem:[%s3 + $0xa0] sm:$0xff]
    %v827 = vld [vmem:[%s3 + $0xa8] sm:$0xff]
    %v828 = vld [vmem:[%s3 + $0xb0] sm:$0xff]
    %v829 = vld [vmem:[%s3 + $0xb8] sm:$0xff]
    %v830 = vld [vmem:[%s3 + $0xc0] sm:$0xff]
    %v831 = vld [vmem:[%s3 + $0xc8] sm:$0xff]
    %v832 = vld [vmem:[%s3 + $0xd0] sm:$0xff]
    %v833 = vld [vmem:[%s3 + $0xd8] sm:$0xff]
    %v834 = vld [vmem:[%s3 + $0xe0] sm:$0xff]
    %v835 = vld [vmem:[%s3 + $0xe8] sm:$0xff]
    %v836 = vld [vmem:[%s3 + $0xf0] sm:$0xff]
    %v837 = vld [vmem:[%s3 + $0xf8] sm:$0xff]
    %v838 = vld [vmem:[%s4] sm:$0x1]
    %v840 = vperm.slane %v838, 0
    %v874 = vunpack.c.l.b16 %v806
    %v875 = vunpack.c.h.b16 %v806
    %v876 = vunpack.c.l.b16 %v807
    %v877 = vunpack.c.h.b16 %v807
    %v878 = vunpack.c.l.b16 %v808
    %v879 = vunpack.c.h.b16 %v808
    %v880 = vunpack.c.l.b16 %v809
    %v881 = vunpack.c.h.b16 %v809
    %v882 = vunpack.c.l.b16 %v810
    %v883 = vunpack.c.h.b16 %v810
    %v884 = vunpack.c.l.b16 %v811
    %v885 = vunpack.c.h.b16 %v811
    %v886 = vunpack.c.l.b16 %v812
    %v887 = vunpack.c.h.b16 %v812
    %v888 = vunpack.c.l.b16 %v813
    %v889 = vunpack.c.h.b16 %v813
    %v890 = vunpack.c.l.b16 %v814
    %v891 = vunpack.c.h.b16 %v814
    %v892 = vunpack.c.l.b16 %v815
    %v893 = vunpack.c.h.b16 %v815
    %v894 = vunpack.c.l.b16 %v816
    %v895 = vunpack.c.h.b16 %v816
    %v896 = vunpack.c.l.b16 %v817
    %v897 = vunpack.c.h.b16 %v817
    %v898 = vunpack.c.l.b16 %v818
    %v899 = vunpack.c.h.b16 %v818
    %v900 = vunpack.c.l.b16 %v819
    %v901 = vunpack.c.h.b16 %v819
    %v902 = vunpack.c.l.b16 %v820
    %v903 = vunpack.c.h.b16 %v820
    %v904 = vunpack.c.l.b16 %v821
    %v905 = vunpack.c.h.b16 %v821
    %v906 = vunpack.c.l.b16 %v822
    %v907 = vunpack.c.h.b16 %v822
    %v908 = vunpack.c.l.b16 %v823
    %v909 = vunpack.c.h.b16 %v823
    %v910 = vunpack.c.l.b16 %v824
    %v911 = vunpack.c.h.b16 %v824
    %v912 = vunpack.c.l.b16 %v825
    %v913 = vunpack.c.h.b16 %v825
    %v914 = vunpack.c.l.b16 %v826
    %v915 = vunpack.c.h.b16 %v826
    %v916 = vunpack.c.l.b16 %v827
    %v917 = vunpack.c.h.b16 %v827
    %v918 = vunpack.c.l.b16 %v828
    %v919 = vunpack.c.h.b16 %v828
    %v920 = vunpack.c.l.b16 %v829
    %v921 = vunpack.c.h.b16 %v829
    %v922 = vunpack.c.l.b16 %v830
    %v923 = vunpack.c.h.b16 %v830
    %v924 = vunpack.c.l.b16 %v831
    %v925 = vunpack.c.h.b16 %v831
    %v926 = vunpack.c.l.b16 %v832
    %v927 = vunpack.c.h.b16 %v832
    %v928 = vunpack.c.l.b16 %v833
    %v929 = vunpack.c.h.b16 %v833
    %v930 = vunpack.c.l.b16 %v834
    %v931 = vunpack.c.h.b16 %v834
    %v932 = vunpack.c.l.b16 %v835
    %v933 = vunpack.c.h.b16 %v835
    %v934 = vunpack.c.l.b16 %v836
    %v935 = vunpack.c.h.b16 %v836
    %v936 = vunpack.c.l.b16 %v837
    %v937 = vunpack.c.h.b16 %v837
    %v938 = vpack.c.b16 %v882, %v874
    %v939 = vpack.c.b16 %v883, %v875
    %v940 = vpack.c.b16 %v884, %v876
    %v941 = vpack.c.b16 %v885, %v877
    %v942 = vpack.c.b16 %v886, %v878
    %v943 = vpack.c.b16 %v887, %v879
    %v944 = vpack.c.b16 %v888, %v880
    %v945 = vpack.c.b16 %v889, %v881
    %v946 = vpack.c.b16 %v898, %v890
    %v947 = vpack.c.b16 %v899, %v891
    %v948 = vpack.c.b16 %v900, %v892
    %v949 = vpack.c.b16 %v901, %v893
    %v950 = vpack.c.b16 %v902, %v894
    %v951 = vpack.c.b16 %v903, %v895
    %v952 = vpack.c.b16 %v904, %v896
    %v953 = vpack.c.b16 %v905, %v897
    %v954 = vpack.c.b16 %v914, %v906
    %v955 = vpack.c.b16 %v915, %v907
    %v956 = vpack.c.b16 %v916, %v908
    %v957 = vpack.c.b16 %v917, %v909
    %v958 = vpack.c.b16 %v918, %v910
    %v959 = vpack.c.b16 %v919, %v911
    %v960 = vpack.c.b16 %v920, %v912
    %v961 = vpack.c.b16 %v921, %v913
    %v962 = vpack.c.b16 %v930, %v922
    %v963 = vpack.c.b16 %v931, %v923
    %v964 = vpack.c.b16 %v932, %v924
    %v965 = vpack.c.b16 %v933, %v925
    %v966 = vpack.c.b16 %v934, %v926
    %v967 = vpack.c.b16 %v935, %v927
    %v968 = vpack.c.b16 %v936, %v928
    %v969 = vpack.c.b16 %v937, %v929
    %1002 = vmatpush.bf16.xpose.msra.mxu0 0
    %1003 = vmatpush.bf16.xpose.msra.mxu0 0
    %1004 = vmatpush.bf16.xpose.msra.mxu0 0
    %1005 = vmatpush.bf16.xpose.msra.mxu0 0
    %1006 = vmatpush.bf16.xpose.msra.mxu0 %v962
    %1007 = vmatpush.bf16.xpose.msra.mxu0 %v954
    %1008 = vmatpush.bf16.xpose.msra.mxu0 %v946
    %1009 = vmatpush.bf16.xpose.msra.mxu0 %v938
    %1010 = vmatmul.bf16.gmra.mxu0 %v798
    %v1011 = vpop.f32.mrf.mxu0
    %v1012 = vadd.f32 %v840, %v1011
    %v1013 = vpop.f32.mrf.mxu0
    %1014 = vdwg.mxu0
    %1015 = vmatpush.bf16.xpose.msra.mxu0 0
    %1016 = vmatpush.bf16.xpose.msra.mxu0 0
    %1017 = vmatpush.bf16.xpose.msra.mxu0 0
    %1018 = vmatpush.bf16.xpose.msra.mxu0 0
    %1019 = vmatpush.bf16.xpose.msra.mxu0 %v963
    %1020 = vmatpush.bf16.xpose.msra.mxu0 %v955
    %1021 = vmatpush.bf16.xpose.msra.mxu0 %v947
    %1022 = vmatpush.bf16.xpose.msra.mxu0 %v939
    %1023 = vmatmul.bf16.gmra.mxu0 %v799
    %v1024 = vpop.f32.mrf.mxu0
    %v1025 = vadd.f32 %v1012, %v1024
    %v1026 = vpop.f32.mrf.mxu0
    %1027 = vdwg.mxu0
    %1028 = vmatpush.bf16.xpose.msra.mxu0 0
    %1029 = vmatpush.bf16.xpose.msra.mxu0 0
    %1030 = vmatpush.bf16.xpose.msra.mxu0 0
    %1031 = vmatpush.bf16.xpose.msra.mxu0 0
    %1032 = vmatpush.bf16.xpose.msra.mxu0 %v964
    %1033 = vmatpush.bf16.xpose.msra.mxu0 %v956
    %1034 = vmatpush.bf16.xpose.msra.mxu0 %v948
    %1035 = vmatpush.bf16.xpose.msra.mxu0 %v940
    %1036 = vmatmul.bf16.gmra.mxu0 %v800
    %v1037 = vpop.f32.mrf.mxu0
    %v1038 = vadd.f32 %v1025, %v1037
    %v1039 = vpop.f32.mrf.mxu0
    %1040 = vdwg.mxu0
    %1041 = vmatpush.bf16.xpose.msra.mxu0 0
    %1042 = vmatpush.bf16.xpose.msra.mxu0 0
    %1043 = vmatpush.bf16.xpose.msra.mxu0 0
    %1044 = vmatpush.bf16.xpose.msra.mxu0 0
    %1045 = vmatpush.bf16.xpose.msra.mxu0 %v965
    %1046 = vmatpush.bf16.xpose.msra.mxu0 %v957
    %1047 = vmatpush.bf16.xpose.msra.mxu0 %v949
    %1048 = vmatpush.bf16.xpose.msra.mxu0 %v941
    %1049 = vmatmul.bf16.gmra.mxu0 %v801
    %v1050 = vpop.f32.mrf.mxu0
    %v1051 = vadd.f32 %v1038, %v1050
    %v1052 = vpop.f32.mrf.mxu0
    %1053 = vdwg.mxu0
    %1054 = vmatpush.bf16.xpose.msra.mxu0 0
    %1055 = vmatpush.bf16.xpose.msra.mxu0 0
    %1056 = vmatpush.bf16.xpose.msra.mxu0 0
    %1057 = vmatpush.bf16.xpose.msra.mxu0 0
    %1058 = vmatpush.bf16.xpose.msra.mxu0 %v966
    %1059 = vmatpush.bf16.xpose.msra.mxu0 %v958
    %1060 = vmatpush.bf16.xpose.msra.mxu0 %v950
    %1061 = vmatpush.bf16.xpose.msra.mxu0 %v942
    %1062 = vmatmul.bf16.gmra.mxu0 %v802
    %v1063 = vpop.f32.mrf.mxu0
    %v1064 = vadd.f32 %v1051, %v1063
    %v1065 = vpop.f32.mrf.mxu0
    %1066 = vdwg.mxu0
    %1067 = vmatpush.bf16.xpose.msra.mxu0 0
    %1068 = vmatpush.bf16.xpose.msra.mxu0 0
    %1069 = vmatpush.bf16.xpose.msra.mxu0 0
    %1070 = vmatpush.bf16.xpose.msra.mxu0 0
    %1071 = vmatpush.bf16.xpose.msra.mxu0 %v967
    %1072 = vmatpush.bf16.xpose.msra.mxu0 %v959
    %1073 = vmatpush.bf16.xpose.msra.mxu0 %v951
    %1074 = vmatpush.bf16.xpose.msra.mxu0 %v943
    %1075 = vmatmul.bf16.gmra.mxu0 %v803
    %v1076 = vpop.f32.mrf.mxu0
    %v1077 = vadd.f32 %v1064, %v1076
    %v1078 = vpop.f32.mrf.mxu0
    %1079 = vdwg.mxu0
    %1080 = vmatpush.bf16.xpose.msra.mxu0 0
    %1081 = vmatpush.bf16.xpose.msra.mxu0 0
    %1082 = vmatpush.bf16.xpose.msra.mxu0 0
    %1083 = vmatpush.bf16.xpose.msra.mxu0 0
    %1084 = vmatpush.bf16.xpose.msra.mxu0 %v968
    %1085 = vmatpush.bf16.xpose.msra.mxu0 %v960
    %1086 = vmatpush.bf16.xpose.msra.mxu0 %v952
    %1087 = vmatpush.bf16.xpose.msra.mxu0 %v944
    %1088 = vmatmul.bf16.gmra.mxu0 %v804
    %v1089 = vpop.f32.mrf.mxu0
    %v1090 = vadd.f32 %v1077, %v1089
    %v1091 = vpop.f32.mrf.mxu0
    %1092 = vdwg.mxu0
    %1093 = vmatpush.bf16.xpose.msra.mxu0 0
    %1094 = vmatpush.bf16.xpose.msra.mxu0 0
    %1095 = vmatpush.bf16.xpose.msra.mxu0 0
    %1096 = vmatpush.bf16.xpose.msra.mxu0 0
    %1097 = vmatpush.bf16.xpose.msra.mxu0 %v969
    %1098 = vmatpush.bf16.xpose.msra.mxu0 %v961
    %1099 = vmatpush.bf16.xpose.msra.mxu0 %v953
    %1100 = vmatpush.bf16.xpose.msra.mxu0 %v945
    %1101 = vmatmul.bf16.gmra.mxu0 %v805
    %v1102 = vpop.f32.mrf.mxu0
    %v1103 = vadd.f32 %v1090, %v1102
    %v1104 = vpop.f32.mrf.mxu0
    %1105 = vdwg.mxu0
    %v1106 = vmul.f32 %v1103, %v1103
    %vm1107 = vcmask 523264
    %v1108 = vsel %vm1107, %v1106, 0.0
    %1109 = vadd.xlane.f32.xlu0 %v1108
    %v1110 = vpop.xlane.xlu0 %1109
    %v1111 = vmax.f32 %v1110, 1e-24
    %v1112 = vrsqrt.pop %v1111
    %v1113 = vmul.f32 %v1112, %v1111
    %v1114 = vmul.f32 %v1113, %v1112
    %v1115 = vmul.f32 0.5, %v1114
    %v1116 = vsub.f32 1.5, %v1115
    %v1117 = vmul.f32 %v1112, %v1116
    %vm1118 = vweird.f32 %v1111
    %vm1119 = vweird.f32 %v1112
    %vm1120 = vmor %vm1118, %vm1119
    %v1121 = vsel %vm1120, %v1112, %v1117
    %v1122 = vmul.f32 %v1103, %v1121
    %1123 = vst.msk [vmem:[#allocation2] sm:$0xff] %vm1107, %v1122
    // Predicated region
    $region22: #{tpu_custom_call.1} parent=1 // pred_check
      _
    $region23: #{tpu_custom_call.1} parent=1 // pred_check_branch
      %1125 = sbr.rel (0) target = $region25
    $region24: #{tpu_custom_call.1} parent=1 // pred_region
      %1127 = vsyncadd [#allocation3], 0
      %s1129 = sshll.u32 [#allocation2], 4
      %s1130 = int_to_ptr.vmem [resolvable:$true] %s1129
      %s1131 = sshll.u32 %s5, 4
      %s1132 = int_to_ptr.hbm [resolvable:$true] %s1131
      %1134 = dma.vmem_to_hbm [thread:$0]  %s1130, 128, %s1132, [#allocation3]
    $region25: #{tpu_custom_call.1} parent=1 // pred_fallthru
      _
    // Predicated region
    $region26: #{tpu_custom_call.1} parent=1 // pred_check
      _
    $region27: #{tpu_custom_call.1} parent=1 // pred_check_branch
      %1136 = sbr.rel (0) target = $region29
    $region28: #{tpu_custom_call.1} parent=1 // pred_region
      %1138 = dma.done [#allocation3], 128
    $region29: #{tpu_custom_call.1} parent=1 // pred_fallthru
      _
    %1139 = vsyncpa [#allocation3], 1

</llo_original>
